<compile_context>
chip_gen: v5e
topology: v5e:2x2
jax: 0.10.0
libtpu: 0.0.40
codegen_flags: <defaults>
</compile_context>

<pallas_src>
import functools
import math

import jax
import jax.numpy as jnp
from jax.experimental import pallas as pl
from jax.experimental.pallas import tpu as pltpu


_VMEM_BUDGET = 24 * 1024 * 1024  # padded pipeline buffers + temps, under the 32 MiB scoped limit


def _round_up(x, m):
    return (x + m - 1) // m * m


def _l2norm_kernel(x_ref, o_ref, *, eps):
    # Block shape: (pre_tile, C, T) -- C on sublanes, spatial tile T on lanes.
    x = x_ref[...]
    xf = x.astype(jnp.float32)                            # f32 accumulation (bf16/fp16 safe)
    sq_sum = jnp.sum(xf * xf, axis=1, keepdims=True)      # (pre_tile, 1, T), sublane reduce
    # F.normalize: denom = norm.clamp_min(eps).  max(sqrt(s), eps) == sqrt(max(s, eps^2)),
    # so one EUP rsqrt replaces sqrt + f32 divide; eps clamp stays in f32 (fp16-safe).
    inv = jax.lax.rsqrt(jnp.maximum(sq_sum, jnp.float32(eps) * jnp.float32(eps)))
    # NOTE: on a ragged final lane block the padding lanes hold garbage; rsqrt of garbage
    # may be NaN/Inf in those (discarded) lanes.  Benign -- do not "fix" with a mask.
    o_ref[...] = (xf * inv).astype(o_ref.dtype)           # broadcast multiply on VPU


def _choose_tiles(pre, c, post, dtype):
    """Pick (pre_tile, lane_tile) sized against the *padded* per-step VMEM footprint.

    Per grid step the pipeline holds 2x double-buffered input blocks + 2x output blocks
    (input dtype, C padded to the dtype's sublane tile) plus ~2 block-sized f32
    temporaries inside the kernel (xf and xf*inv).
    """
    itemsize = jnp.dtype(dtype).itemsize
    pack = max(1, 4 // itemsize)                  # sub-32-bit dtypes pack along sublanes
    c_pad_io = _round_up(c, 8 * pack)             # padded C for the in/out pipeline buffers
    c_pad_f32 = _round_up(c, 8)                   # padded C for the f32 temporaries
    # Padded bytes per single lane column of one block:
    #   2 (double-buffer) * (in + out) + ~2 f32 temps
    bytes_per_lane = 2 * 2 * c_pad_io * itemsize + 2 * c_pad_f32 * 4

    if post <= 128:
        lane_tile = post                          # full-dim block (allowed even if < 128)
    else:
        max_lanes = max(128, (_VMEM_BUDGET // bytes_per_lane) // 128 * 128)
        post_128 = (post // 128) * 128
        cap = min(max_lanes, post_128)
        lane_tile = None
        if post % 128 == 0:
            # Prefer a tile that evenly divides post: every block full, all stores unmasked.
            for cand in range(cap, 127, -128):
                if post % cand == 0:
                    lane_tile = cand
                    break
        if lane_tile is None:
            lane_tile = cap                        # ragged last block, handled by Pallas

    # When one lane block covers the whole row, batch `pre` rows per block so small-
    # spatial shapes (tiny H*W) do not degenerate into a grid of KiB-sized steps.
    pre_tile = 1
    if lane_tile == post:
        bytes_per_pre_row = bytes_per_lane * _round_up(post, 128)
        pre_tile = max(1, min(pre, _VMEM_BUDGET // max(1, bytes_per_pre_row)))
    return pre_tile, lane_tile


def l2_normalize(x, dim=1, eps=1e-12):
    """Pallas equivalent of torch.nn.functional.normalize(x, p=2, dim=dim, eps=eps)."""
    orig_shape = x.shape
    dim = dim % x.ndim
    c = int(orig_shape[dim])
    pre = int(math.prod(orig_shape[:dim]))
    post = int(math.prod(orig_shape[dim + 1:]))

    # Contiguous reshape only -- no transpose, no extra HBM traffic.
    x3 = x.reshape(pre, c, post)

    pre_tile, lane_tile = _choose_tiles(pre, c, post, x.dtype)
    n_pre = pl.cdiv(pre, pre_tile)
    n_lane = pl.cdiv(post, lane_tile)

    kernel = functools.partial(_l2norm_kernel, eps=float(eps))
    block = (pre_tile, c, lane_tile)

    # Put the larger parallel extent on the leading grid axis so megacore sharding
    # (v7x: 2 TensorCores/chip) splits the big axis and stays balanced.
    if n_lane > n_pre:
        grid = (n_lane, n_pre)
        index_map = lambda j, i: (i, 0, j)
    else:
        grid = (n_pre, n_lane)
        index_map = lambda i, j: (i, 0, j)

    out3 = pl.pallas_call(
        kernel,
        out_shape=jax.ShapeDtypeStruct((pre, c, post), x.dtype),
        grid_spec=pltpu.PrefetchScalarGridSpec(
            num_scalar_prefetch=0,
            grid=grid,
            in_specs=[pl.BlockSpec(block, index_map)],
            out_specs=pl.BlockSpec(block, index_map),
        ),
        compiler_params=pltpu.CompilerParams(
            dimension_semantics=("parallel", "parallel"),
            vmem_limit_bytes=32 * 1024 * 1024,   # safe on v5e/v6e/v7x (v7x scoped default)
        ),
    )(x3)

    return out3.reshape(orig_shape)


if __name__ == "__main__":
    key = jax.random.PRNGKey(0)
    # NCHW, as the PyTorch module would receive (dim=1 -> channels)
    x = jax.random.normal(key, (2, 4, 16, 16), dtype=jnp.float32)

    y = l2_normalize(x, dim=1, eps=1e-12)
    y = jax.block_until_ready(y)

    # Reference check in plain JAX (same semantics as F.normalize)
    norm = jnp.sqrt(jnp.sum(x * x, axis=1, keepdims=True))
    ref = x / jnp.maximum(norm, 1e-12)
    assert y.shape == x.shape and y.dtype == x.dtype
    assert jnp.allclose(y, ref, atol=1e-6, rtol=1e-6)

    print("KERNEL_OK")
</pallas_src>

<mosaic_0001>
module attributes {stable_mosaic.version = 11 : i64} {
  func.func @_l2norm_kernel(%arg0: i32, %arg1: i32, %arg2: memref<2x4x256xf32, #tpu.memory_space<vmem>>, %arg3: memref<2x4x256xf32, #tpu.memory_space<vmem>>) attributes {dimension_semantics = [#tpu.dimension_semantics<parallel>, #tpu.dimension_semantics<parallel>], iteration_bounds = array<i64: 1, 1>, scalar_prefetch = 0 : i64, scratch_operands = 0 : i64, tpu.core_type = #tpu.core_type<tc>, window_params = [{transform_indices = @transform_0, window_bounds = array<i64: 2, 4, 256>}, {transform_indices = @transform_1, window_bounds = array<i64: 2, 4, 256>}]} {
    %c0 = arith.constant 0 : index
    %c0_0 = arith.constant 0 : index
    %c0_1 = arith.constant 0 : index
    %0 = vector.load %arg2[%c0, %c0_0, %c0_1] : memref<2x4x256xf32, #tpu.memory_space<vmem>>, vector<2x4x256xf32>
    %1 = arith.mulf %0, %0 : vector<2x4x256xf32>
    %cst = arith.constant dense<0.000000e+00> : vector<2x256xf32>
    %2 = vector.multi_reduction <add>, %1, %cst [1] : vector<2x4x256xf32> to vector<2x256xf32>
    %3 = vector.shape_cast %2 : vector<2x256xf32> to vector<2x1x256xf32>
    %cst_2 = arith.constant 9.99999996E-13 : f32
    %cst_3 = arith.constant 9.99999996E-13 : f32
    %4 = arith.mulf %cst_2, %cst_3 : f32
    %5 = vector.broadcast %4 : f32 to vector<2x1x256xf32>
    %6 = arith.maximumf %3, %5 : vector<2x1x256xf32>
    %7 = math.rsqrt %6 : vector<2x1x256xf32>
    %8 = vector.broadcast %7 : vector<2x1x256xf32> to vector<2x4x256xf32>
    %9 = arith.mulf %0, %8 : vector<2x4x256xf32>
    %c0_4 = arith.constant 0 : index
    %c0_5 = arith.constant 0 : index
    %c0_6 = arith.constant 0 : index
    %10 = vector.load %arg3[%c0_4, %c0_5, %c0_6] : memref<2x4x256xf32, #tpu.memory_space<vmem>>, vector<2x4x256xf32>
    tpu.vector_store %arg3[%c0_4, %c0_5, %c0_6], %9 {strides = array<i32>} : memref<2x4x256xf32, #tpu.memory_space<vmem>>, vector<2x4x256xf32>,
    return
  }
  func.func @transform_0(%arg0: i32, %arg1: i32) -> (i32, i32, i32) {
    %c0_i32 = arith.constant 0 : i32
    %c0_i32_0 = arith.constant 0 : i32
    return %arg0, %c0_i32, %arg1 : i32, i32, i32
  }
  func.func @transform_1(%arg0: i32, %arg1: i32) -> (i32, i32, i32) {
    %c0_i32 = arith.constant 0 : i32
    %c0_i32_0 = arith.constant 0 : i32
    return %arg0, %c0_i32, %arg1 : i32, i32, i32
  }
}

</mosaic_0001>

<llo_original>
// kernel: tpu_custom_call.1
$region0: #{tpu_custom_call.1}
  #allocation0 [shape = 'u32[]', space=smem, size = 0x4, offset = 0x4, fixed_abs, tag = 'smem constant byte address 0x4 - core index']
  #allocation1 [shape = 'u32[72,128]{1,0:T(1,128)}', space=vmem, size = 0x9000, scoped, tag = 'internal scratch']
  %s0 = inlined_call_operand.hbm [shape: f32[2,4,256], index: 0, kind: input, shape index: {}]
  %s1 = inlined_call_operand.hbm [shape: f32[2,4,256], index: 1, kind: output, shape index: {}]
  %s2 = sld [smem:[#allocation0]]
  $region18: #{tpu_custom_call.1} parent=0
    _
  %s4 = ssub.s32 1, %s2
  %s5 = scalar_select 0, %s4, %s2
  $region1: #{tpu_custom_call.1} parent=0
    #allocation2 [shape = 'u8[8192]{0}', space=vmem, size = 0x2000, scoped, tag = 'input window, operand 0, single buffered']
    #allocation3 [shape = 's32[1]{0}', space=sflag, size = 0x4, scoped, tag = 'scoped memory for tpu_custom_call.1']
    #allocation4 [shape = 's32[1]{0}', space=sflag, size = 0x4, scoped, tag = 'scoped memory for tpu_custom_call.1']
    #allocation5 [shape = 'u8[8192]{0}', space=vmem, size = 0x2000, scoped, tag = 'output window, operand 0, single buffered']
    %6 = vsyncpa [#allocation3], 0
    %7 = vsyncpa [#allocation4], 0
    // Predicated region
    $region2: #{tpu_custom_call.1} parent=1 // pred_check
      _
    $region3: #{tpu_custom_call.1} parent=1 // pred_check_branch
      %9 = sbr.rel (0) target = $region5
    $region4: #{tpu_custom_call.1} parent=1 // pred_region
      %11 = vsyncadd [#allocation3], 0
      %s12 = sshll.u32 %s0, 4
      %s13 = int_to_ptr.hbm [resolvable:$true] %s12
      %s14 = sshll.u32 [#allocation2], 4
      %s15 = int_to_ptr.vmem [resolvable:$true] %s14
      %20 = dma.hbm_to_vmem [thread:$0]  %s13, 256, %s15, [#allocation3], 128, 128, 8
    $region5: #{tpu_custom_call.1} parent=1 // pred_fallthru
      _
    // Predicated region
    $region6: #{tpu_custom_call.1} parent=1 // pred_check
      _
    $region7: #{tpu_custom_call.1} parent=1 // pred_check_branch
      %22 = sbr.rel (0) target = $region9
    $region8: #{tpu_custom_call.1} parent=1 // pred_region
      %24 = dma.done [#allocation3], 256
    $region9: #{tpu_custom_call.1} parent=1 // pred_fallthru
      _
    %v25 = vld [vmem:[#allocation2] sm:$0xff]
    %v26 = vld [vmem:[#allocation2 + $0x8] sm:$0xff]
    %v27 = vmul.f32 %v25, %v25
    %v28 = vmul.f32 %v26, %v26
    %31 = vst [vmem:[#allocation1] ss:$2 sm:$0xff] %v27
    %v32 = vld.sshfl [vmem:[#allocation1] sm:$0xff pattern:$0x75316420]
    %v33 = vld.sshfl [vmem:[#allocation1 + $0x8] sm:$0xff pattern:$0x75316420]
    %s34 = scalar_lea.vmem [#allocation1], 16
    %35 = vst [vmem:[%s34] ss:$2 sm:$0xff] %v28
    %v36 = vld.sshfl [vmem:[#allocation1 + $0x10] sm:$0xff pattern:$0x75316420]
    %v37 = vld.sshfl [vmem:[#allocation1 + $0x18] sm:$0xff pattern:$0x75316420]
    %vm42 = vcmask 1043456
    %v43 = vsel %vm42, %v32, 0.0
    %v44 = vrot.slane %v43, 4
    %v45 = vadd.f32 %v43, %v44
    %v46 = vrot.slane %v45, 2
    %v47 = vadd.f32 %v45, %v46
    %v48 = vrot.slane %v47, 1
    %v49 = vadd.f32 %v47, %v48
    %v50 = vsel %vm42, %v33, 0.0
    %v51 = vrot.slane %v50, 4
    %v52 = vadd.f32 %v50, %v51
    %v53 = vrot.slane %v52, 2
    %v54 = vadd.f32 %v52, %v53
    %v55 = vrot.slane %v54, 1
    %v56 = vadd.f32 %v54, %v55
    %v57 = vsel %vm42, %v36, 0.0
    %v58 = vrot.slane %v57, 4
    %v59 = vadd.f32 %v57, %v58
    %v60 = vrot.slane %v59, 2
    %v61 = vadd.f32 %v59, %v60
    %v62 = vrot.slane %v61, 1
    %v63 = vadd.f32 %v61, %v62
    %v64 = vsel %vm42, %v37, 0.0
    %v65 = vrot.slane %v64, 4
    %v66 = vadd.f32 %v64, %v65
    %v67 = vrot.slane %v66, 2
    %v68 = vadd.f32 %v66, %v67
    %v69 = vrot.slane %v68, 1
    %v70 = vadd.f32 %v68, %v69
    %v71 = vmax.f32 %v49, 1e-24
    %v72 = vmax.f32 %v56, 1e-24
    %v73 = vmax.f32 %v63, 1e-24
    %v74 = vmax.f32 %v70, 1e-24
    %v75 = vrsqrt.pop %v71
    %v76 = vmul.f32 %v75, %v71
    %v77 = vmul.f32 %v76, %v75
    %v78 = vmul.f32 0.5, %v77
    %v79 = vsub.f32 1.5, %v78
    %v80 = vmul.f32 %v75, %v79
    %vm81 = vweird.f32 %v71
    %vm82 = vweird.f32 %v75
    %vm83 = vmor %vm81, %vm82
    %v84 = vsel %vm83, %v75, %v80
    %v85 = vrsqrt.pop %v72
    %v86 = vmul.f32 %v85, %v72
    %v87 = vmul.f32 %v86, %v85
    %v88 = vmul.f32 0.5, %v87
    %v89 = vsub.f32 1.5, %v88
    %v90 = vmul.f32 %v85, %v89
    %vm91 = vweird.f32 %v72
    %vm92 = vweird.f32 %v85
    %vm93 = vmor %vm91, %vm92
    %v94 = vsel %vm93, %v85, %v90
    %v95 = vrsqrt.pop %v73
    %v96 = vmul.f32 %v95, %v73
    %v97 = vmul.f32 %v96, %v95
    %v98 = vmul.f32 0.5, %v97
    %v99 = vsub.f32 1.5, %v98
    %v100 = vmul.f32 %v95, %v99
    %vm101 = vweird.f32 %v73
    %vm102 = vweird.f32 %v95
    %vm103 = vmor %vm101, %vm102
    %v104 = vsel %vm103, %v95, %v100
    %v105 = vrsqrt.pop %v74
    %v106 = vmul.f32 %v105, %v74
    %v107 = vmul.f32 %v106, %v105
    %v108 = vmul.f32 0.5, %v107
    %v109 = vsub.f32 1.5, %v108
    %v110 = vmul.f32 %v105, %v109
    %vm111 = vweird.f32 %v74
    %vm112 = vweird.f32 %v105
    %vm113 = vmor %vm111, %vm112
    %v114 = vsel %vm113, %v105, %v110
    %v119 = vrot.slane %v94, 4
    %v120 = vrot.slane %v114, 4
    %v121 = vsel %vm42, %v84, %v119
    %v122 = vsel %vm42, %v104, %v120
    %v125 = vmul.f32 %v25, %v121
    %v126 = vmul.f32 %v26, %v122
    %127 = vst [vmem:[#allocation5] sm:$0xff] %v125
    %128 = vst [vmem:[#allocation5 + $0x8] sm:$0xff] %v126
    // Predicated region
    $region10: #{tpu_custom_call.1} parent=1 // pred_check
      _
    $region11: #{tpu_custom_call.1} parent=1 // pred_check_branch
      %130 = sbr.rel (0) target = $region13
    $region12: #{tpu_custom_call.1} parent=1 // pred_region
      %132 = vsyncadd [#allocation4], 0
      %s133 = sshll.u32 [#allocation5], 4
      %s134 = int_to_ptr.vmem [resolvable:$true] %s133
      %s135 = sshll.u32 %s1, 4
      %s136 = int_to_ptr.hbm [resolvable:$true] %s135
      %141 = dma.vmem_to_hbm [thread:$0]  %s134, 256, %s136, [#allocation4], 128, 128, 8
    $region13: #{tpu_custom_call.1} parent=1 // pred_fallthru
      _
    // Predicated region
    $region14: #{tpu_custom_call.1} parent=1 // pred_check
      _
    $region15: #{tpu_custom_call.1} parent=1 // pred_check_branch
      %143 = sbr.rel (0) target = $region17
    $region16: #{tpu_custom_call.1} parent=1 // pred_region
      %145 = dma.done [#allocation4], 256
    $region17: #{tpu_custom_call.1} parent=1 // pred_fallthru
      _
    %146 = vsyncpa [#allocation3], 1
    %147 = vsyncpa [#allocation4], 1

</llo_original>
